<compile_context>
chip_gen: v5e
topology: v5e:2x2
jax: 0.10.0
libtpu: 0.0.40
codegen_flags: <defaults>
</compile_context>

<pallas_src>
import functools

import jax
import jax.numpy as jnp
from jax.experimental import pallas as pl
from jax.experimental.pallas import tpu as pltpu

BETA = 0.999
EPS = 1e-5

_LANE = 1024          # lane-dense last dim (multiple of 128)
_MAX_TILE_ROWS = 256  # sublanes per tile (multiple of 8) -> 1 MiB f32 tiles

_SMEM_SPEC = pl.BlockSpec(memory_space=pltpu.SMEM)
_SCALAR = jax.ShapeDtypeStruct((1, 1), jnp.float32)


def _round_up(n, m):
    return ((n + m - 1) // m) * m


def _layout(n):
    """Pick a lane-dense [rows_padded, C] layout and row-tile for n elements."""
    c = _LANE if n >= _LANE else 128
    rows = max(1, -(-n // c))
    tile_r = min(_MAX_TILE_ROWS, _round_up(rows, 8))
    rows_p = _round_up(rows, tile_r)
    return c, rows_p, tile_r


def _pad_2d(x_flat, c, rows_p):
    n = x_flat.shape[0]
    total = rows_p * c
    if total != n:
        x_flat = jnp.pad(x_flat, (0, total - n))
    return x_flat.reshape(rows_p, c)


# ----------------------------------------------------------------------------
# Kernels
# ----------------------------------------------------------------------------
def _update_masked_kernel(mean_ref, meansq_ref, debias_ref, x_ref, m_ref,
                          new_mean_ref, new_meansq_ref, new_debias_ref,
                          acc_x, acc_xsq, acc_m):
    i = pl.program_id(0)

    @pl.when(i == 0)
    def _():
        acc_x[...] = jnp.zeros_like(acc_x)
        acc_xsq[...] = jnp.zeros_like(acc_xsq)
        acc_m[...] = jnp.zeros_like(acc_m)

    x = x_ref[...].astype(jnp.float32)
    m = m_ref[...].astype(jnp.float32)
    xm = x * m                                  # torch: x = x * mask
    acc_x[...] += xm
    acc_xsq[...] += xm * xm
    acc_m[...] += m

    @pl.when(i == pl.num_programs(0) - 1)
    def _():
        factor = jnp.sum(acc_m[...])
        safe_factor = jnp.where(factor > 0.0, factor, 1.0)  # fully-masked guard
        batch_mean = jnp.sum(acc_x[...]) / safe_factor
        batch_sq_mean = jnp.sum(acc_xsq[...]) / safe_factor
        new_mean_ref[0, 0] = BETA * mean_ref[0, 0] + batch_mean * (1.0 - BETA)
        new_meansq_ref[0, 0] = (BETA * meansq_ref[0, 0]
                                + batch_sq_mean * (1.0 - BETA))
        new_debias_ref[0, 0] = BETA * debias_ref[0, 0] + 1.0 - BETA


def _update_unmasked_kernel(mean_ref, meansq_ref, debias_ref, factor_ref,
                            x_ref,
                            new_mean_ref, new_meansq_ref, new_debias_ref,
                            acc_x, acc_xsq):
    i = pl.program_id(0)

    @pl.when(i == 0)
    def _():
        acc_x[...] = jnp.zeros_like(acc_x)
        acc_xsq[...] = jnp.zeros_like(acc_xsq)

    x = x_ref[...].astype(jnp.float32)
    acc_x[...] += x
    acc_xsq[...] += x * x

    @pl.when(i == pl.num_programs(0) - 1)
    def _():
        factor = factor_ref[0, 0]               # true element count (no pad)
        batch_mean = jnp.sum(acc_x[...]) / factor
        batch_sq_mean = jnp.sum(acc_xsq[...]) / factor
        new_mean_ref[0, 0] = BETA * mean_ref[0, 0] + batch_mean * (1.0 - BETA)
        new_meansq_ref[0, 0] = (BETA * meansq_ref[0, 0]
                                + batch_sq_mean * (1.0 - BETA))
        new_debias_ref[0, 0] = BETA * debias_ref[0, 0] + 1.0 - BETA


def _normalize_kernel(mean_ref, invstd_ref, x_ref, o_ref):
    x = x_ref[...].astype(jnp.float32)
    o_ref[...] = jnp.clip((x - mean_ref[0, 0]) * invstd_ref[0, 0], -5.0, 5.0)


def _denormalize_kernel(mean_ref, std_ref, x_ref, o_ref):
    x = x_ref[...].astype(jnp.float32)
    o_ref[...] = x * std_ref[0, 0] + mean_ref[0, 0]


# ----------------------------------------------------------------------------
# pallas_call wrappers
# ----------------------------------------------------------------------------
@jax.jit
def rms_update_masked(x, mask, mean, mean_sq, debias):
    n = x.size
    c, rows_p, tile_r = _layout(n)
    x2d = _pad_2d(x.reshape(-1), c, rows_p)          # native dtype, no upcast
    m2d = _pad_2d(mask.reshape(-1), c, rows_p)       # bool/int8/float mask
    grid = (rows_p // tile_r,)
    tiled = pl.BlockSpec((tile_r, c), lambda i: (i, 0))
    return pl.pallas_call(
        _update_masked_kernel,
        out_shape=(_SCALAR, _SCALAR, _SCALAR),
        grid=grid,
        in_specs=[_SMEM_SPEC, _SMEM_SPEC, _SMEM_SPEC, tiled, tiled],
        out_specs=(_SMEM_SPEC, _SMEM_SPEC, _SMEM_SPEC),
        scratch_shapes=[pltpu.VMEM((tile_r, c), jnp.float32)] * 3,
        compiler_params=pltpu.CompilerParams(
            dimension_semantics=("arbitrary",)),
    )(mean, mean_sq, debias, x2d, m2d)


@jax.jit
def rms_update_unmasked(x, mean, mean_sq, debias):
    n = x.size
    c, rows_p, tile_r = _layout(n)
    x2d = _pad_2d(x.reshape(-1), c, rows_p)          # native dtype, no upcast
    factor = jnp.full((1, 1), float(n), jnp.float32)
    grid = (rows_p // tile_r,)
    tiled = pl.BlockSpec((tile_r, c), lambda i: (i, 0))
    return pl.pallas_call(
        _update_unmasked_kernel,
        out_shape=(_SCALAR, _SCALAR, _SCALAR),
        grid=grid,
        in_specs=[_SMEM_SPEC, _SMEM_SPEC, _SMEM_SPEC, _SMEM_SPEC, tiled],
        out_specs=(_SMEM_SPEC, _SMEM_SPEC, _SMEM_SPEC),
        scratch_shapes=[pltpu.VMEM((tile_r, c), jnp.float32)] * 2,
        compiler_params=pltpu.CompilerParams(
            dimension_semantics=("arbitrary",)),
    )(mean, mean_sq, debias, factor, x2d)


def _debiased_mean_std(mean, mean_sq, debias):
    db = jnp.maximum(debias, EPS)
    m = mean / db
    msq = mean_sq / db
    var = jnp.maximum(msq - m * m, 0.01)
    return m, jnp.sqrt(var)


@functools.partial(jax.jit, static_argnames=("denorm",))
def _rms_elementwise(x, mean, mean_sq, debias, denorm=False):
    n = x.size
    c, rows_p, tile_r = _layout(n)
    x2d = _pad_2d(x.reshape(-1), c, rows_p)          # native dtype, no upcast
    m, std = _debiased_mean_std(mean, mean_sq, debias)
    scale = std if denorm else 1.0 / std             # inv_std: mul, not div
    kernel = _denormalize_kernel if denorm else _normalize_kernel
    grid = (rows_p // tile_r,)
    tiled = pl.BlockSpec((tile_r, c), lambda i: (i, 0))
    out2d = pl.pallas_call(
        kernel,
        out_shape=jax.ShapeDtypeStruct((rows_p, c), jnp.float32),
        grid=grid,
        in_specs=[_SMEM_SPEC, _SMEM_SPEC, tiled],
        out_specs=tiled,
        compiler_params=pltpu.CompilerParams(
            dimension_semantics=("parallel",)),
    )(m, scale, x2d)
    return out2d.reshape(-1)[:n].reshape(x.shape)


# ----------------------------------------------------------------------------
# Thin stateful wrapper mirroring the nn.Module
# ----------------------------------------------------------------------------
class ExponentialRunningMeanStd:
    def __init__(self):
        # reset_parameters(): all-zero (1,) state; kept as (1,1) f32 for SMEM.
        self.mean = jnp.zeros((1, 1), jnp.float32)
        self.mean_sq = jnp.zeros((1, 1), jnp.float32)
        self.debias = jnp.zeros((1, 1), jnp.float32)

    def update(self, x, mask=None):
        if mask is None:
            self.mean, self.mean_sq, self.debias = rms_update_unmasked(
                x, self.mean, self.mean_sq, self.debias)
        else:
            self.mean, self.mean_sq, self.debias = rms_update_masked(
                x, mask, self.mean, self.mean_sq, self.debias)

    def normalize(self, x):
        return _rms_elementwise(x, self.mean, self.mean_sq, self.debias,
                                denorm=False)

    def denormalize(self, x):
        return _rms_elementwise(x, self.mean, self.mean_sq, self.debias,
                                denorm=True)

    def mean_std(self):  # plain-JAX glue mirror of the torch method
        m, s = _debiased_mean_std(self.mean, self.mean_sq, self.debias)
        return m.reshape(1), s.reshape(1)


# ----------------------------------------------------------------------------
if __name__ == "__main__":
    key = jax.random.PRNGKey(0)
    kx, km = jax.random.split(key)
    B, T = 8, 128  # small shapes: batch=8, seq=128
    x = jax.random.normal(kx, (B, T), jnp.float32) * 2.0 + 0.5
    mask = jax.random.uniform(km, (B, T)) > 0.2      # bool mask, cast in-kernel

    rms = ExponentialRunningMeanStd()
    rms.update(x, mask)        # masked update
    rms.update(x * 0.5)        # unmasked update (mask=None path)

    y = rms.normalize(x)
    z = rms.denormalize(y)
    jax.block_until_ready((rms.mean, rms.mean_sq, rms.debias, y, z))

    # reference check in plain JAX (f32, same as kernel precision)
    beta, eps = BETA, EPS
    mask_f = mask.astype(jnp.float32)
    xm = x * mask_f
    f1 = mask_f.sum()
    rm = (xm.sum() / f1) * (1 - beta)
    rsq = ((xm * xm).sum() / f1) * (1 - beta)
    rdb = 1 - beta
    x2 = x * 0.5
    f2 = float(x2.size)
    rm = beta * rm + (x2.sum() / f2) * (1 - beta)
    rsq = beta * rsq + ((x2 * x2).sum() / f2) * (1 - beta)
    rdb = beta * rdb + 1 - beta
    dm = rm / jnp.maximum(rdb, eps)
    dsq = rsq / jnp.maximum(rdb, eps)
    dstd = jnp.sqrt(jnp.maximum(dsq - dm * dm, 0.01))
    y_ref = jnp.clip((x - dm) / dstd, -5.0, 5.0)
    z_ref = y_ref * dstd + dm

    assert jnp.allclose(rms.mean[0, 0], rm, rtol=1e-4, atol=1e-6)
    assert jnp.allclose(rms.mean_sq[0, 0], rsq, rtol=1e-4, atol=1e-6)
    assert jnp.allclose(rms.debias[0, 0], rdb, rtol=1e-5, atol=1e-7)
    assert jnp.allclose(y, y_ref, rtol=1e-4, atol=1e-4)
    assert jnp.allclose(z, z_ref, rtol=1e-4, atol=1e-4)
    print("KERNEL_OK")
</pallas_src>

<mosaic_0001>
module attributes {stable_mosaic.version = 11 : i64} {
  func.func @_update_masked_kernel(%arg0: i32, %arg1: memref<1x1xf32, #tpu.memory_space<smem>>, %arg2: memref<1x1xf32, #tpu.memory_space<smem>>, %arg3: memref<1x1xf32, #tpu.memory_space<smem>>, %arg4: memref<8x1024xf32, #tpu.memory_space<vmem>>, %arg5: memref<8x1024xi32, #tpu.memory_space<vmem>>, %arg6: memref<1x1xf32, #tpu.memory_space<smem>>, %arg7: memref<1x1xf32, #tpu.memory_space<smem>>, %arg8: memref<1x1xf32, #tpu.memory_space<smem>>, %arg9: memref<8x1024xf32, #tpu.memory_space<vmem>>, %arg10: memref<8x1024xf32, #tpu.memory_space<vmem>>, %arg11: memref<8x1024xf32, #tpu.memory_space<vmem>>) attributes {dimension_semantics = [#tpu.dimension_semantics<arbitrary>], iteration_bounds = array<i64: 1>, scalar_prefetch = 0 : i64, scratch_operands = 3 : i64, tpu.core_type = #tpu.core_type<tc>, window_params = [{transform_indices = @transform_0, window_bounds = array<i64: 1, 1>}, {transform_indices = @transform_1, window_bounds = array<i64: 1, 1>}, {transform_indices = @transform_2, window_bounds = array<i64: 1, 1>}, {transform_indices = @transform_3, window_bounds = array<i64: 8, 1024>}, {transform_indices = @transform_4, window_bounds = array<i64: 8, 1024>}, {transform_indices = @transform_5, window_bounds = array<i64: 1, 1>}, {transform_indices = @transform_6, window_bounds = array<i64: 1, 1>}, {transform_indices = @transform_7, window_bounds = array<i64: 1, 1>}]} {
    %c0_i32 = arith.constant 0 : i32
    %0 = arith.cmpi eq, %arg0, %c0_i32 : i32
    %1 = arith.extui %0 : i1 to i32
    %c0_i32_0 = arith.constant 0 : i32
    %2 = arith.cmpi ne, %1, %c0_i32_0 : i32
    scf.if %2 {
      %cst_18 = arith.constant 0.000000e+00 : f32
      %22 = vector.broadcast %cst_18 : f32 to vector<8x1024xf32>
      %c0_19 = arith.constant 0 : index
      %c0_20 = arith.constant 0 : index
      %23 = vector.load %arg9[%c0_19, %c0_20] : memref<8x1024xf32, #tpu.memory_space<vmem>>, vector<8x1024xf32>
      tpu.vector_store %arg9[%c0_19, %c0_20], %22 {strides = array<i32>} : memref<8x1024xf32, #tpu.memory_space<vmem>>, vector<8x1024xf32>,
      %cst_21 = arith.constant 0.000000e+00 : f32
      %24 = vector.broadcast %cst_21 : f32 to vector<8x1024xf32>
      %c0_22 = arith.constant 0 : index
      %c0_23 = arith.constant 0 : index
      %25 = vector.load %arg10[%c0_22, %c0_23] : memref<8x1024xf32, #tpu.memory_space<vmem>>, vector<8x1024xf32>
      tpu.vector_store %arg10[%c0_22, %c0_23], %24 {strides = array<i32>} : memref<8x1024xf32, #tpu.memory_space<vmem>>, vector<8x1024xf32>,
      %cst_24 = arith.constant 0.000000e+00 : f32
      %26 = vector.broadcast %cst_24 : f32 to vector<8x1024xf32>
      %c0_25 = arith.constant 0 : index
      %c0_26 = arith.constant 0 : index
      %27 = vector.load %arg11[%c0_25, %c0_26] : memref<8x1024xf32, #tpu.memory_space<vmem>>, vector<8x1024xf32>
      tpu.vector_store %arg11[%c0_25, %c0_26], %26 {strides = array<i32>} : memref<8x1024xf32, #tpu.memory_space<vmem>>, vector<8x1024xf32>,
    } else {
    }
    %c0 = arith.constant 0 : index
    %c0_1 = arith.constant 0 : index
    %3 = vector.load %arg4[%c0, %c0_1] : memref<8x1024xf32, #tpu.memory_space<vmem>>, vector<8x1024xf32>
    %c0_2 = arith.constant 0 : index
    %c0_3 = arith.constant 0 : index
    %4 = vector.load %arg5[%c0_2, %c0_3] : memref<8x1024xi32, #tpu.memory_space<vmem>>, vector<8x1024xi32>
    %cst = arith.constant dense<0> : vector<8x1024xi32>
    %5 = arith.cmpi ne, %4, %cst : vector<8x1024xi32>
    %6 = arith.extui %5 : vector<8x1024xi1> to vector<8x1024xi32>
    %7 = arith.sitofp %6 : vector<8x1024xi32> to vector<8x1024xf32>
    %8 = arith.mulf %3, %7 : vector<8x1024xf32>
    %c0_4 = arith.constant 0 : index
    %c0_5 = arith.constant 0 : index
    %9 = vector.load %arg9[%c0_4, %c0_5] : memref<8x1024xf32, #tpu.memory_space<vmem>>, vector<8x1024xf32>
    %10 = arith.addf %9, %8 : vector<8x1024xf32>
    %c0_6 = arith.constant 0 : index
    %c0_7 = arith.constant 0 : index
    %11 = vector.load %arg9[%c0_6, %c0_7] : memref<8x1024xf32, #tpu.memory_space<vmem>>, vector<8x1024xf32>
    tpu.vector_store %arg9[%c0_6, %c0_7], %10 {strides = array<i32>} : memref<8x1024xf32, #tpu.memory_space<vmem>>, vector<8x1024xf32>,
    %c0_8 = arith.constant 0 : index
    %c0_9 = arith.constant 0 : index
    %12 = vector.load %arg10[%c0_8, %c0_9] : memref<8x1024xf32, #tpu.memory_space<vmem>>, vector<8x1024xf32>
    %13 = arith.mulf %8, %8 : vector<8x1024xf32>
    %14 = arith.addf %12, %13 : vector<8x1024xf32>
    %c0_10 = arith.constant 0 : index
    %c0_11 = arith.constant 0 : index
    %15 = vector.load %arg10[%c0_10, %c0_11] : memref<8x1024xf32, #tpu.memory_space<vmem>>, vector<8x1024xf32>
    tpu.vector_store %arg10[%c0_10, %c0_11], %14 {strides = array<i32>} : memref<8x1024xf32, #tpu.memory_space<vmem>>, vector<8x1024xf32>,
    %c0_12 = arith.constant 0 : index
    %c0_13 = arith.constant 0 : index
    %16 = vector.load %arg11[%c0_12, %c0_13] : memref<8x1024xf32, #tpu.memory_space<vmem>>, vector<8x1024xf32>
    %17 = arith.addf %16, %7 : vector<8x1024xf32>
    %c0_14 = arith.constant 0 : index
    %c0_15 = arith.constant 0 : index
    %18 = vector.load %arg11[%c0_14, %c0_15] : memref<8x1024xf32, #tpu.memory_space<vmem>>, vector<8x1024xf32>
    tpu.vector_store %arg11[%c0_14, %c0_15], %17 {strides = array<i32>} : memref<8x1024xf32, #tpu.memory_space<vmem>>, vector<8x1024xf32>,
    %c0_i32_16 = arith.constant 0 : i32
    %19 = arith.cmpi eq, %arg0, %c0_i32_16 : i32
    %20 = arith.extui %19 : i1 to i32
    %c0_i32_17 = arith.constant 0 : i32
    %21 = arith.cmpi ne, %20, %c0_i32_17 : i32
    scf.if %21 {
      %c0_18 = arith.constant 0 : index
      %c0_19 = arith.constant 0 : index
      %22 = vector.load %arg11[%c0_18, %c0_19] : memref<8x1024xf32, #tpu.memory_space<vmem>>, vector<8x1024xf32>
      %23 = vector.shape_cast %22 : vector<8x1024xf32> to vector<1x8x1024xf32>
      %cst_20 = arith.constant dense<0.000000e+00> : vector<1xf32>
      %24 = vector.multi_reduction <add>, %23, %cst_20 [1, 2] : vector<1x8x1024xf32> to vector<1xf32>
      %25 = vector.shape_cast %24 : vector<1xf32> to vector<1x1x1xf32>
      %26 = vector.extract %25[0, 0, 0] : f32 from vector<1x1x1xf32>
      %cst_21 = arith.constant 0.000000e+00 : f32
      %27 = arith.cmpf ogt, %26, %cst_21 : f32
      %cst_22 = arith.constant 1.000000e+00 : f32
      %28 = arith.select %27, %26, %cst_22 : f32
      %c0_23 = arith.constant 0 : index
      %c0_24 = arith.constant 0 : index
      %29 = vector.load %arg9[%c0_23, %c0_24] : memref<8x1024xf32, #tpu.memory_space<vmem>>, vector<8x1024xf32>
      %30 = vector.shape_cast %29 : vector<8x1024xf32> to vector<1x8x1024xf32>
      %cst_25 = arith.constant dense<0.000000e+00> : vector<1xf32>
      %31 = vector.multi_reduction <add>, %30, %cst_25 [1, 2] : vector<1x8x1024xf32> to vector<1xf32>
      %32 = vector.shape_cast %31 : vector<1xf32> to vector<1x1x1xf32>
      %33 = vector.extract %32[0, 0, 0] : f32 from vector<1x1x1xf32>
      %34 = arith.divf %33, %28 : f32
      %c0_26 = arith.constant 0 : index
      %c0_27 = arith.constant 0 : index
      %35 = vector.load %arg10[%c0_26, %c0_27] : memref<8x1024xf32, #tpu.memory_space<vmem>>, vector<8x1024xf32>
      %36 = vector.shape_cast %35 : vector<8x1024xf32> to vector<1x8x1024xf32>
      %cst_28 = arith.constant dense<0.000000e+00> : vector<1xf32>
      %37 = vector.multi_reduction <add>, %36, %cst_28 [1, 2] : vector<1x8x1024xf32> to vector<1xf32>
      %38 = vector.shape_cast %37 : vector<1xf32> to vector<1x1x1xf32>
      %39 = vector.extract %38[0, 0, 0] : f32 from vector<1x1x1xf32>
      %40 = arith.divf %39, %28 : f32
      %c0_29 = arith.constant 0 : index
      %c0_30 = arith.constant 0 : index
      %41 = memref.load %arg1[%c0_29, %c0_30] : memref<1x1xf32, #tpu.memory_space<smem>>
      %cst_31 = arith.constant 9.990000e-01 : f32
      %42 = arith.mulf %cst_31, %41 : f32
      %cst_32 = arith.constant 1.000000e-03 : f32
      %43 = arith.mulf %34, %cst_32 : f32
      %44 = arith.addf %42, %43 : f32
      %c0_33 = arith.constant 0 : index
      %c0_34 = arith.constant 0 : index
      %45 = memref.load %arg6[%c0_33, %c0_34] : memref<1x1xf32, #tpu.memory_space<smem>>
      memref.store %44, %arg6[%c0_33, %c0_34] : memref<1x1xf32, #tpu.memory_space<smem>>
      %c0_35 = arith.constant 0 : index
      %c0_36 = arith.constant 0 : index
      %46 = memref.load %arg2[%c0_35, %c0_36] : memref<1x1xf32, #tpu.memory_space<smem>>
      %cst_37 = arith.constant 9.990000e-01 : f32
      %47 = arith.mulf %cst_37, %46 : f32
      %cst_38 = arith.constant 1.000000e-03 : f32
      %48 = arith.mulf %40, %cst_38 : f32
      %49 = arith.addf %47, %48 : f32
      %c0_39 = arith.constant 0 : index
      %c0_40 = arith.constant 0 : index
      %50 = memref.load %arg7[%c0_39, %c0_40] : memref<1x1xf32, #tpu.memory_space<smem>>
      memref.store %49, %arg7[%c0_39, %c0_40] : memref<1x1xf32, #tpu.memory_space<smem>>
      %c0_41 = arith.constant 0 : index
      %c0_42 = arith.constant 0 : index
      %51 = memref.load %arg3[%c0_41, %c0_42] : memref<1x1xf32, #tpu.memory_space<smem>>
      %cst_43 = arith.constant 9.990000e-01 : f32
      %52 = arith.mulf %cst_43, %51 : f32
      %cst_44 = arith.constant 1.000000e+00 : f32
      %53 = arith.addf %52, %cst_44 : f32
      %cst_45 = arith.constant 9.990000e-01 : f32
      %54 = arith.subf %53, %cst_45 : f32
      %c0_46 = arith.constant 0 : index
      %c0_47 = arith.constant 0 : index
      %55 = memref.load %arg8[%c0_46, %c0_47] : memref<1x1xf32, #tpu.memory_space<smem>>
      memref.store %54, %arg8[%c0_46, %c0_47] : memref<1x1xf32, #tpu.memory_space<smem>>
    } else {
    }
    return
  }
  func.func @transform_0(%arg0: i32) -> (i32, i32) {
    %c0_i32 = arith.constant 0 : i32
    %c0_i32_0 = arith.constant 0 : i32
    %c0_i32_1 = arith.constant 0 : i32
    return %c0_i32, %c0_i32_0 : i32, i32
  }
  func.func @transform_1(%arg0: i32) -> (i32, i32) {
    %c0_i32 = arith.constant 0 : i32
    %c0_i32_0 = arith.constant 0 : i32
    %c0_i32_1 = arith.constant 0 : i32
    return %c0_i32, %c0_i32_0 : i32, i32
  }
  func.func @transform_2(%arg0: i32) -> (i32, i32) {
    %c0_i32 = arith.constant 0 : i32
    %c0_i32_0 = arith.constant 0 : i32
    %c0_i32_1 = arith.constant 0 : i32
    return %c0_i32, %c0_i32_0 : i32, i32
  }
  func.func @transform_3(%arg0: i32) -> (i32, i32) {
    %c0_i32 = arith.constant 0 : i32
    %c0_i32_0 = arith.constant 0 : i32
    return %arg0, %c0_i32 : i32, i32
  }
  func.func @transform_4(%arg0: i32) -> (i32, i32) {
    %c0_i32 = arith.constant 0 : i32
    %c0_i32_0 = arith.constant 0 : i32
    return %arg0, %c0_i32 : i32, i32
  }
  func.func @transform_5(%arg0: i32) -> (i32, i32) {
    %c0_i32 = arith.constant 0 : i32
    %c0_i32_0 = arith.constant 0 : i32
    %c0_i32_1 = arith.constant 0 : i32
    return %c0_i32, %c0_i32_0 : i32, i32
  }
  func.func @transform_6(%arg0: i32) -> (i32, i32) {
    %c0_i32 = arith.constant 0 : i32
    %c0_i32_0 = arith.constant 0 : i32
    %c0_i32_1 = arith.constant 0 : i32
    return %c0_i32, %c0_i32_0 : i32, i32
  }
  func.func @transform_7(%arg0: i32) -> (i32, i32) {
    %c0_i32 = arith.constant 0 : i32
    %c0_i32_0 = arith.constant 0 : i32
    %c0_i32_1 = arith.constant 0 : i32
    return %c0_i32, %c0_i32_0 : i32, i32
  }
}

</mosaic_0001>

<llo_original>
// kernel: rms_update_masked.1
$region0: #{rms_update_masked.1}
  #allocation0 [shape = 'u32[]', space=smem, size = 0x4, offset = 0x4, fixed_abs, tag = 'smem constant byte address 0x4 - core index']
  #allocation1 [shape = 'u32[72,128]{1,0:T(1,128)}', space=vmem, size = 0x9000, scoped, tag = 'internal scratch']
  #allocation2 [shape = 'f32[8,1024]{1,0:T(8,128)}', space=vmem, size = 0x8000, scoped, tag = 'scratch operand']
  #allocation3 [shape = 'f32[8,1024]{1,0:T(8,128)}', space=vmem, size = 0x8000, scoped, tag = 'scratch operand']
  #allocation4 [shape = 'f32[8,1024]{1,0:T(8,128)}', space=vmem, size = 0x8000, scoped, tag = 'scratch operand']
  #allocation5 [shape = 'f32[1,1]{1,0:T(1,128)S(6)}', space=smem, size = 0x200, scoped, tag = 'scoped memory for rms_update_masked.1']
  #allocation6 [shape = 'f32[1,1]{1,0:T(1,128)S(6)}', space=smem, size = 0x200, scoped, tag = 'scoped memory for rms_update_masked.1']
  #allocation7 [shape = 'f32[1,1]{1,0:T(1,128)S(6)}', space=smem, size = 0x200, scoped, tag = 'scoped memory for rms_update_masked.1']
  %s0 = inlined_call_operand.<no memory space> [shape: f32[1,1], index: 0, kind: input, shape index: {}]
  %s1 = inlined_call_operand.<no memory space> [shape: f32[1,1], index: 1, kind: input, shape index: {}]
  %s2 = inlined_call_operand.<no memory space> [shape: f32[1,1], index: 2, kind: input, shape index: {}]
  %s3 = inlined_call_operand.vmem [shape: f32[8,1024], index: 3, kind: input, shape index: {}]
  %s4 = inlined_call_operand.vmem [shape: s32[8,1024], index: 4, kind: input, shape index: {}]
  %s5 = inlined_call_operand.hbm [shape: f32[1,1], index: 5, kind: output, shape index: {0}]
  %s6 = inlined_call_operand.hbm [shape: f32[1,1], index: 6, kind: output, shape index: {1}]
  %s7 = inlined_call_operand.hbm [shape: f32[1,1], index: 7, kind: output, shape index: {2}]
  %8 = xla_tuple %s5, %s6, %s7
  %s9 = sld [smem:[#allocation0]]
  $region54: #{rms_update_masked.1} parent=0
    _
  %s11 = ssub.s32 1, %s9
  %s12 = scalar_select 0, %s11, %s9
  %13 = sst [smem:[#allocation5]] %s0
  %14 = sst [smem:[#allocation6]] %s1
  %15 = sst [smem:[#allocation7]] %s2
  $region1: #{rms_update_masked.1} parent=0
    #allocation8 [shape = 'u8[512]{0}', space=smem, size = 0x200, scoped, tag = 'output window, operand 0, single buffered']
    #allocation9 [shape = 's32[1]{0}', space=sflag, size = 0x4, scoped, tag = 'scoped memory for rms_update_masked.1']
    #allocation10 [shape = 'u8[512]{0}', space=smem, size = 0x200, scoped, tag = 'output window, operand 1, single buffered']
    #allocation11 [shape = 's32[1]{0}', space=sflag, size = 0x4, scoped, tag = 'scoped memory for rms_update_masked.1']
    #allocation12 [shape = 'u8[512]{0}', space=smem, size = 0x200, scoped, tag = 'output window, operand 2, single buffered']
    %16 = vsyncpa [#allocation9], 0
    %17 = vsyncpa [#allocation11], 0
    // Predicated region
    $region2: #{rms_update_masked.1} parent=1 // pred_check
      _
    $region3: #{rms_update_masked.1} parent=1 // pred_check_branch
      %19 = sbr.rel (0) target = $region5
    $region4: #{rms_update_masked.1} parent=1 // pred_region
      _
    $region5: #{rms_update_masked.1} parent=1 // pred_fallthru
      _
    // Predicated region
    $region6: #{rms_update_masked.1} parent=1 // pred_check
      _
    $region7: #{rms_update_masked.1} parent=1 // pred_check_branch
      %21 = sbr.rel (0) target = $region9
    $region8: #{rms_update_masked.1} parent=1 // pred_region
      _
    $region9: #{rms_update_masked.1} parent=1 // pred_fallthru
      _
    // Predicated region
    $region10: #{rms_update_masked.1} parent=1 // pred_check
      _
    $region11: #{rms_update_masked.1} parent=1 // pred_check_branch
      %23 = sbr.rel (0) target = $region13
    $region12: #{rms_update_masked.1} parent=1 // pred_region
      _
    $region13: #{rms_update_masked.1} parent=1 // pred_fallthru
      _
    // Predicated region
    $region14: #{rms_update_masked.1} parent=1 // pred_check
      _
    $region15: #{rms_update_masked.1} parent=1 // pred_check_branch
      %25 = sbr.rel (0) target = $region17
    $region16: #{rms_update_masked.1} parent=1 // pred_region
      _
    $region17: #{rms_update_masked.1} parent=1 // pred_fallthru
      _
    // Predicated region
    $region18: #{rms_update_masked.1} parent=1 // pred_check
      _
    $region19: #{rms_update_masked.1} parent=1 // pred_check_branch
      %27 = sbr.rel (0) target = $region21
    $region20: #{rms_update_masked.1} parent=1 // pred_region
      _
    $region21: #{rms_update_masked.1} parent=1 // pred_fallthru
      _
    %p28 = scmp.eq.s32.totalorder 0, 0
    // Predicated region
    $region22: #{rms_update_masked.1} parent=1 // pred_check
      %p29 = pneg %p28
    $region23: #{rms_update_masked.1} parent=1 // pred_check_branch
      %31 = sbr.rel (%p29) target = $region25
    $region24: #{rms_update_masked.1} parent=1 // pred_region
      %32 = vst [vmem:[#allocation2] sm:$0xff] 0.0
      %33 = vst [vmem:[#allocation2 + $0x8] sm:$0xff] 0.0
      %34 = vst [vmem:[#allocation2 + $0x10] sm:$0xff] 0.0
      %35 = vst [vmem:[#allocation2 + $0x18] sm:$0xff] 0.0
      %36 = vst [vmem:[#allocation2 + $0x20] sm:$0xff] 0.0
      %37 = vst [vmem:[#allocation2 + $0x28] sm:$0xff] 0.0
      %38 = vst [vmem:[#allocation2 + $0x30] sm:$0xff] 0.0
      %39 = vst [vmem:[#allocation2 + $0x38] sm:$0xff] 0.0
      %40 = vst [vmem:[#allocation3] sm:$0xff] 0.0
      %41 = vst [vmem:[#allocation3 + $0x8] sm:$0xff] 0.0
      %42 = vst [vmem:[#allocation3 + $0x10] sm:$0xff] 0.0
      %43 = vst [vmem:[#allocation3 + $0x18] sm:$0xff] 0.0
      %44 = vst [vmem:[#allocation3 + $0x20] sm:$0xff] 0.0
      %45 = vst [vmem:[#allocation3 + $0x28] sm:$0xff] 0.0
      %46 = vst [vmem:[#allocation3 + $0x30] sm:$0xff] 0.0
      %47 = vst [vmem:[#allocation3 + $0x38] sm:$0xff] 0.0
      %48 = vst [vmem:[#allocation4] sm:$0xff] 0.0
      %49 = vst [vmem:[#allocation4 + $0x8] sm:$0xff] 0.0
      %50 = vst [vmem:[#allocation4 + $0x10] sm:$0xff] 0.0
      %51 = vst [vmem:[#allocation4 + $0x18] sm:$0xff] 0.0
      %52 = vst [vmem:[#allocation4 + $0x20] sm:$0xff] 0.0
      %53 = vst [vmem:[#allocation4 + $0x28] sm:$0xff] 0.0
      %54 = vst [vmem:[#allocation4 + $0x30] sm:$0xff] 0.0
      %55 = vst [vmem:[#allocation4 + $0x38] sm:$0xff] 0.0
    $region25: #{rms_update_masked.1} parent=1 // pred_fallthru
      _
    %v56 = vld [vmem:[%s3] sm:$0xff]
    %v57 = vld [vmem:[%s3 + $0x8] sm:$0xff]
    %v58 = vld [vmem:[%s3 + $0x10] sm:$0xff]
    %v59 = vld [vmem:[%s3 + $0x18] sm:$0xff]
    %v60 = vld [vmem:[%s3 + $0x20] sm:$0xff]
    %v61 = vld [vmem:[%s3 + $0x28] sm:$0xff]
    %v62 = vld [vmem:[%s3 + $0x30] sm:$0xff]
    %v63 = vld [vmem:[%s3 + $0x38] sm:$0xff]
    %v64 = vld [vmem:[%s4] sm:$0xff]
    %v65 = vld [vmem:[%s4 + $0x8] sm:$0xff]
    %v66 = vld [vmem:[%s4 + $0x10] sm:$0xff]
    %v67 = vld [vmem:[%s4 + $0x18] sm:$0xff]
    %v68 = vld [vmem:[%s4 + $0x20] sm:$0xff]
    %v69 = vld [vmem:[%s4 + $0x28] sm:$0xff]
    %v70 = vld [vmem:[%s4 + $0x30] sm:$0xff]
    %v71 = vld [vmem:[%s4 + $0x38] sm:$0xff]
    %vm72 = vcmp.ne.s32.totalorder %v64, 0
    %vm73 = vcmp.ne.s32.totalorder %v65, 0
    %vm74 = vcmp.ne.s32.totalorder %v66, 0
    %vm75 = vcmp.ne.s32.totalorder %v67, 0
    %vm76 = vcmp.ne.s32.totalorder %v68, 0
    %vm77 = vcmp.ne.s32.totalorder %v69, 0
    %vm78 = vcmp.ne.s32.totalorder %v70, 0
    %vm79 = vcmp.ne.s32.totalorder %v71, 0
    %v80 = vsel %vm72, 1, 0
    %v81 = vsel %vm73, 1, 0
    %v82 = vsel %vm74, 1, 0
    %v83 = vsel %vm75, 1, 0
    %v84 = vsel %vm76, 1, 0
    %v85 = vsel %vm77, 1, 0
    %v86 = vsel %vm78, 1, 0
    %v87 = vsel %vm79, 1, 0
    %v88 = vcvt.s32.f32 %v80
    %v89 = vcvt.s32.f32 %v81
    %v90 = vcvt.s32.f32 %v82
    %v91 = vcvt.s32.f32 %v83
    %v92 = vcvt.s32.f32 %v84
    %v93 = vcvt.s32.f32 %v85
    %v94 = vcvt.s32.f32 %v86
    %v95 = vcvt.s32.f32 %v87
    %v96 = vmul.f32 %v56, %v88
    %v97 = vmul.f32 %v57, %v89
    %v98 = vmul.f32 %v58, %v90
    %v99 = vmul.f32 %v59, %v91
    %v100 = vmul.f32 %v60, %v92
    %v101 = vmul.f32 %v61, %v93
    %v102 = vmul.f32 %v62, %v94
    %v103 = vmul.f32 %v63, %v95
    %v104 = vld [vmem:[#allocation2] sm:$0xff]
    %v105 = vld [vmem:[#allocation2 + $0x8] sm:$0xff]
    %v106 = vld [vmem:[#allocation2 + $0x10] sm:$0xff]
    %v107 = vld [vmem:[#allocation2 + $0x18] sm:$0xff]
    %v108 = vld [vmem:[#allocation2 + $0x20] sm:$0xff]
    %v109 = vld [vmem:[#allocation2 + $0x28] sm:$0xff]
    %v110 = vld [vmem:[#allocation2 + $0x30] sm:$0xff]
    %v111 = vld [vmem:[#allocation2 + $0x38] sm:$0xff]
    %v112 = vadd.f32 %v104, %v96
    %v113 = vadd.f32 %v105, %v97
    %v114 = vadd.f32 %v106, %v98
    %v115 = vadd.f32 %v107, %v99
    %v116 = vadd.f32 %v108, %v100
    %v117 = vadd.f32 %v109, %v101
    %v118 = vadd.f32 %v110, %v102
    %v119 = vadd.f32 %v111, %v103
    %120 = vst [vmem:[#allocation2] sm:$0xff] %v112
    %121 = vst [vmem:[#allocation2 + $0x8] sm:$0xff] %v113
    %122 = vst [vmem:[#allocation2 + $0x10] sm:$0xff] %v114
    %123 = vst [vmem:[#allocation2 + $0x18] sm:$0xff] %v115
    %124 = vst [vmem:[#allocation2 + $0x20] sm:$0xff] %v116
    %125 = vst [vmem:[#allocation2 + $0x28] sm:$0xff] %v117
    %126 = vst [vmem:[#allocation2 + $0x30] sm:$0xff] %v118
    %127 = vst [vmem:[#allocation2 + $0x38] sm:$0xff] %v119
    %v128 = vld [vmem:[#allocation3] sm:$0xff]
    %v129 = vld [vmem:[#allocation3 + $0x8] sm:$0xff]
    %v130 = vld [vmem:[#allocation3 + $0x10] sm:$0xff]
    %v131 = vld [vmem:[#allocation3 + $0x18] sm:$0xff]
    %v132 = vld [vmem:[#allocation3 + $0x20] sm:$0xff]
    %v133 = vld [vmem:[#allocation3 + $0x28] sm:$0xff]
    %v134 = vld [vmem:[#allocation3 + $0x30] sm:$0xff]
    %v135 = vld [vmem:[#allocation3 + $0x38] sm:$0xff]
    %v136 = vmul.f32 %v96, %v96
    %v137 = vmul.f32 %v97, %v97
    %v138 = vmul.f32 %v98, %v98
    %v139 = vmul.f32 %v99, %v99
    %v140 = vmul.f32 %v100, %v100
    %v141 = vmul.f32 %v101, %v101
    %v142 = vmul.f32 %v102, %v102
    %v143 = vmul.f32 %v103, %v103
    %v144 = vadd.f32 %v128, %v136
    %v145 = vadd.f32 %v129, %v137
    %v146 = vadd.f32 %v130, %v138
    %v147 = vadd.f32 %v131, %v139
    %v148 = vadd.f32 %v132, %v140
    %v149 = vadd.f32 %v133, %v141
    %v150 = vadd.f32 %v134, %v142
    %v151 = vadd.f32 %v135, %v143
    %152 = vst [vmem:[#allocation3] sm:$0xff] %v144
    %153 = vst [vmem:[#allocation3 + $0x8] sm:$0xff] %v145
    %154 = vst [vmem:[#allocation3 + $0x10] sm:$0xff] %v146
    %155 = vst [vmem:[#allocation3 + $0x18] sm:$0xff] %v147
    %156 = vst [vmem:[#allocation3 + $0x20] sm:$0xff] %v148
    %157 = vst [vmem:[#allocation3 + $0x28] sm:$0xff] %v149
    %158 = vst [vmem:[#allocation3 + $0x30] sm:$0xff] %v150
    %159 = vst [vmem:[#allocation3 + $0x38] sm:$0xff] %v151
    %v160 = vld [vmem:[#allocation4] sm:$0xff]
    %v161 = vld [vmem:[#allocation4 + $0x8] sm:$0xff]
    %v162 = vld [vmem:[#allocation4 + $0x10] sm:$0xff]
    %v163 = vld [vmem:[#allocation4 + $0x18] sm:$0xff]
    %v164 = vld [vmem:[#allocation4 + $0x20] sm:$0xff]
    %v165 = vld [vmem:[#allocation4 + $0x28] sm:$0xff]
    %v166 = vld [vmem:[#allocation4 + $0x30] sm:$0xff]
    %v167 = vld [vmem:[#allocation4 + $0x38] sm:$0xff]
    %v168 = vadd.f32 %v160, %v88
    %v169 = vadd.f32 %v161, %v89
    %v170 = vadd.f32 %v162, %v90
    %v171 = vadd.f32 %v163, %v91
    %v172 = vadd.f32 %v164, %v92
    %v173 = vadd.f32 %v165, %v93
    %v174 = vadd.f32 %v166, %v94
    %v175 = vadd.f32 %v167, %v95
    %176 = vst [vmem:[#allocation4] sm:$0xff] %v168
    %177 = vst [vmem:[#allocation4 + $0x8] sm:$0xff] %v169
    %178 = vst [vmem:[#allocation4 + $0x10] sm:$0xff] %v170
    %179 = vst [vmem:[#allocation4 + $0x18] sm:$0xff] %v171
    %180 = vst [vmem:[#allocation4 + $0x20] sm:$0xff] %v172
    %181 = vst [vmem:[#allocation4 + $0x28] sm:$0xff] %v173
    %182 = vst [vmem:[#allocation4 + $0x30] sm:$0xff] %v174
    %183 = vst [vmem:[#allocation4 + $0x38] sm:$0xff] %v175
    // Predicated region
    $region26: #{rms_update_masked.1} parent=1 // pred_check
      %p184 = pneg %p28
    $region27: #{rms_update_masked.1} parent=1 // pred_check_branch
      %186 = sbr.rel (%p184) target = $region29
    $region28: #{rms_update_masked.1} parent=1 // pred_region
      %v187 = vld [vmem:[#allocation4] sm:$0xff]
      %v188 = vld [vmem:[#allocation4 + $0x8] sm:$0xff]
      %v189 = vld [vmem:[#allocation4 + $0x10] sm:$0xff]
      %v190 = vld [vmem:[#allocation4 + $0x18] sm:$0xff]
      %v191 = vld [vmem:[#allocation4 + $0x20] sm:$0xff]
      %v192 = vld [vmem:[#allocation4 + $0x28] sm:$0xff]
      %v193 = vld [vmem:[#allocation4 + $0x30] sm:$0xff]
      %v194 = vld [vmem:[#allocation4 + $0x38] sm:$0xff]
      %v195 = vadd.f32 %v187, %v188
      %v196 = vadd.f32 %v195, %v189
      %v197 = vadd.f32 %v196, %v190
      %v198 = vadd.f32 %v197, %v191
      %v199 = vadd.f32 %v198, %v192
      %v200 = vadd.f32 %v199, %v193
      %v201 = vadd.f32 %v200, %v194
      %202 = vadd.xlane.f32.xlu0 %v201
      %v203 = vpop.xlane.xlu0 %202
      %v204 = vrot.slane %v203, 4
      %v205 = vadd.f32 %v203, %v204
      %v206 = vrot.slane %v205, 2
      %v207 = vadd.f32 %v205, %v206
      %v208 = vrot.slane %v207, 1
      %v209 = vadd.f32 %v207, %v208
      %s210 = vtos %v209
      %p211 = scmp.gt.f32.partialorder %s210, 0.0
      %s212 = scalar_select %p211, %s210, 1.0
      %v213 = vld [vmem:[#allocation2] sm:$0xff]
      %v214 = vld [vmem:[#allocation2 + $0x8] sm:$0xff]
      %v215 = vld [vmem:[#allocation2 + $0x10] sm:$0xff]
      %v216 = vld [vmem:[#allocation2 + $0x18] sm:$0xff]
      %v217 = vld [vmem:[#allocation2 + $0x20] sm:$0xff]
      %v218 = vld [vmem:[#allocation2 + $0x28] sm:$0xff]
      %v219 = vld [vmem:[#allocation2 + $0x30] sm:$0xff]
      %v220 = vld [vmem:[#allocation2 + $0x38] sm:$0xff]
      %v221 = vadd.f32 %v213, %v214
      %v222 = vadd.f32 %v221, %v215
      %v223 = vadd.f32 %v222, %v216
      %v224 = vadd.f32 %v223, %v217
      %v225 = vadd.f32 %v224, %v218
      %v226 = vadd.f32 %v225, %v219
      %v227 = vadd.f32 %v226, %v220
      %228 = vadd.xlane.f32.xlu0 %v227
      %v229 = vpop.xlane.xlu0 %228
      %v230 = vrot.slane %v229, 4
      %v231 = vadd.f32 %v229, %v230
      %v232 = vrot.slane %v231, 2
      %v233 = vadd.f32 %v231, %v232
      %v234 = vrot.slane %v233, 1
      %v235 = vadd.f32 %v233, %v234
      %s236 = vtos %v235
      %v237 = vstv %s212
      %v238 = vrcp.pop %v237
      %v239 = vmul.f32 %v237, %v238
      %v240 = vsub.f32 1.0, %v239
      %v241 = vmul.f32 %v238, %v240
      %v242 = vadd.f32 %v238, %v241
      %vm243 = vweird.f32 %v237
      %vm244 = vweird.f32 %v238
      %vm245 = vmor %vm243, %vm244
      %v246 = vsel %vm245, %v238, %v242
      %v247 = vand.u32 2147483647, %v237
      %vm248 = vcmp.eq.f32.partialorder %v247, 8.507059e+37
      %v249 = vand.u32 %v237, 2147483648
      %v250 = vor.u32 1.1754944e-38, %v249
      %v251 = vsel %vm248, %v250, %v246
      %s252 = vtos %v251
      %s253 = smul.f32 %s236, %s252
      %v254 = vld [vmem:[#allocation3] sm:$0xff]
      %v255 = vld [vmem:[#allocation3 + $0x8] sm:$0xff]
      %v256 = vld [vmem:[#allocation3 + $0x10] sm:$0xff]
      %v257 = vld [vmem:[#allocation3 + $0x18] sm:$0xff]
      %v258 = vld [vmem:[#allocation3 + $0x20] sm:$0xff]
      %v259 = vld [vmem:[#allocation3 + $0x28] sm:$0xff]
      %v260 = vld [vmem:[#allocation3 + $0x30] sm:$0xff]
      %v261 = vld [vmem:[#allocation3 + $0x38] sm:$0xff]
      %v262 = vadd.f32 %v254, %v255
      %v263 = vadd.f32 %v262, %v256
      %v264 = vadd.f32 %v263, %v257
      %v265 = vadd.f32 %v264, %v258
      %v266 = vadd.f32 %v265, %v259
      %v267 = vadd.f32 %v266, %v260
      %v268 = vadd.f32 %v267, %v261
      %269 = vadd.xlane.f32.xlu0 %v268
      %v270 = vpop.xlane.xlu0 %269
      %v271 = vrot.slane %v270, 4
      %v272 = vadd.f32 %v270, %v271
      %v273 = vrot.slane %v272, 2
      %v274 = vadd.f32 %v272, %v273
      %v275 = vrot.slane %v274, 1
      %v276 = vadd.f32 %v274, %v275
      %s277 = vtos %v276
      %v278 = vstv %s212
      %v279 = vrcp.pop %v278
      %v280 = vmul.f32 %v278, %v279
      %v281 = vsub.f32 1.0, %v280
      %v282 = vmul.f32 %v279, %v281
      %v283 = vadd.f32 %v279, %v282
      %vm284 = vweird.f32 %v278
      %vm285 = vweird.f32 %v279
      %vm286 = vmor %vm284, %vm285
      %v287 = vsel %vm286, %v279, %v283
      %v288 = vand.u32 2147483647, %v278
      %vm289 = vcmp.eq.f32.partialorder %v288, 8.507059e+37
      %v290 = vand.u32 %v278, 2147483648
      %v291 = vor.u32 1.1754944e-38, %v290
      %v292 = vsel %vm289, %v291, %v287
      %s293 = vtos %v292
      %s294 = smul.f32 %s277, %s293
      %s295 = sld [smem:[#allocation5]]
      %s296 = smul.f32 %s295, 0.999
      %s297 = smul.f32 %s253, 0.001
      %s298 = sadd.f32 %s296, %s297
      %s299 = scalar_lea.smem [#allocation8], 0
      %300 = sst [smem:[%s299]] %s298
      %s301 = sld [smem:[#allocation6]]
      %s302 = smul.f32 %s301, 0.999
      %s303 = smul.f32 %s294, 0.001
      %s304 = sadd.f32 %s302, %s303
      %s305 = scalar_lea.smem [#allocation10], 0
      %306 = sst [smem:[%s305]] %s304
      %s307 = sld [smem:[#allocation7]]
      %s308 = smul.f32 %s307, 0.999
      %s309 = sadd.f32 %s308, 1.0
      %s310 = ssub.f32 %s309, 0.999
      %s311 = scalar_lea.smem [#allocation12], 0
      %312 = sst [smem:[%s311]] %s310
    $region29: #{rms_update_masked.1} parent=1 // pred_fallthru
      _
    // Predicated region
    $region30: #{rms_update_masked.1} parent=1 // pred_check
      _
    $region31: #{rms_update_masked.1} parent=1 // pred_check_branch
      %314 = sbr.rel (0) target = $region33
    $region32: #{rms_update_masked.1} parent=1 // pred_region
      %316 = vsyncadd [#allocation9], 0
      %s318 = sshll.u32 %s5, 4
      %s319 = int_to_ptr.hbm [resolvable:$true] %s318
      %321 = dma.smem_to_hbm [#allocation8], 16, %s319, [#allocation9]
    $region33: #{rms_update_masked.1} parent=1 // pred_fallthru
      _
    // Predicated region
    $region34: #{rms_update_masked.1} parent=1 // pred_check
      _
    $region35: #{rms_update_masked.1} parent=1 // pred_check_branch
      %323 = sbr.rel (0) target = $region37
    $region36: #{rms_update_masked.1} parent=1 // pred_region
      %325 = vsyncadd [#allocation11], 0
      %s327 = sshll.u32 %s6, 4
      %s328 = int_to_ptr.hbm [resolvable:$true] %s327
      %330 = dma.smem_to_hbm [#allocation10], 16, %s328, [#allocation11]
    $region37: #{rms_update_masked.1} parent=1 // pred_fallthru
      _
    // Predicated region
    $region38: #{rms_update_masked.1} parent=1 // pred_check
      _
    $region39: #{rms_update_masked.1} parent=1 // pred_check_branch
      %332 = sbr.rel (0) target = $region41
    $region40: #{rms_update_masked.1} parent=1 // pred_region
      %334 = vsyncadd [#allocation11], 0
      %s336 = sshll.u32 %s7, 4
      %s337 = int_to_ptr.hbm [resolvable:$true] %s336
      %339 = dma.smem_to_hbm [#allocation12], 16, %s337, [#allocation11]
    $region41: #{rms_update_masked.1} parent=1 // pred_fallthru
      _
    // Predicated region
    $region42: #{rms_update_masked.1} parent=1 // pred_check
      _
    $region43: #{rms_update_masked.1} parent=1 // pred_check_branch
      %341 = sbr.rel (0) target = $region45
    $region44: #{rms_update_masked.1} parent=1 // pred_region
      %343 = dma.done [#allocation9], 16
    $region45: #{rms_update_masked.1} parent=1 // pred_fallthru
      _
    // Predicated region
    $region46: #{rms_update_masked.1} parent=1 // pred_check
      _
    $region47: #{rms_update_masked.1} parent=1 // pred_check_branch
      %345 = sbr.rel (0) target = $region49
    $region48: #{rms_update_masked.1} parent=1 // pred_region
      %347 = dma.done [#allocation11], 16
    $region49: #{rms_update_masked.1} parent=1 // pred_fallthru
      _
    // Predicated region
    $region50: #{rms_update_masked.1} parent=1 // pred_check
      _
    $region51: #{rms_update_masked.1} parent=1 // pred_check_branch
      %349 = sbr.rel (0) target = $region53
    $region52: #{rms_update_masked.1} parent=1 // pred_region
      %351 = dma.done [#allocation11], 16
    $region53: #{rms_update_masked.1} parent=1 // pred_fallthru
      _
    %352 = sfence
    %353 = vsyncpa [#allocation9], 1
    %354 = vsyncpa [#allocation11], 1

</llo_original>
